<compile_context>
chip_gen: v6e
topology: v6e:2x2x1
jax: 0.10.0
libtpu: 0.0.40
codegen_flags: <defaults>
</compile_context>

<pallas_src>
from typing import NamedTuple

import jax
import jax.numpy as jnp
from jax.experimental import pallas as pl
from jax.experimental.pallas import tpu as pltpu

NEG_SLOPE = 0.01  # nn.LeakyReLU default negative_slope


def _round_up(x: int, m: int) -> int:
    return ((x + m - 1) // m) * m


def _device_defaults():
    """Per-TPU-generation tile and scoped-VMEM defaults."""
    try:
        kind = jax.devices()[0].device_kind.lower()
    except Exception:
        kind = ""
    if "v7" in kind:
        # 64 MiB VMEM per TensorCore, ~310 flop/byte ridge: 768 tiles reach roofline.
        return dict(tm=768, tn=768, tk=512, vmem=48 * 1024 * 1024, two_cores=True)
    if "v6" in kind:
        # 128 MiB VMEM, ~670 flop/byte ridge: go big.
        return dict(tm=1024, tn=1024, tk=512, vmem=100 * 1024 * 1024, two_cores=False)
    # v5e (and unknown): ridge ~240 flop/byte, 512 tiles are compute-bound already.
    return dict(tm=512, tn=512, tk=512, vmem=64 * 1024 * 1024, two_cores=False)


def _pick_tile(full: int, default_tile: int, unit: int) -> int:
    """Largest tile (multiple of `unit`) that avoids gross over-padding of `full`."""
    full_r = _round_up(max(full, 1), unit)
    if full_r <= default_tile:
        return full_r  # single block, zero over-padding
    best_t = default_tile
    best_pad = _round_up(full_r, default_tile) - full_r
    t = default_tile - unit
    # Only consider tiles down to default/2 so arithmetic intensity stays high.
    while t >= max(unit, default_tile // 2) and best_pad > 0:
        pad = _round_up(full_r, t) - full_r
        if pad < best_pad:
            best_t, best_pad = t, pad
        t -= unit
    return best_t


class LinearReluPlan(NamedTuple):
    B: int
    Din: int
    Dout: int
    tm: int
    tn: int
    tk: int
    Mp: int
    Kp: int
    Np: int
    vmem_limit_bytes: int
    compute_dtype: object
    out_dtype: object


def plan_linear_relu(B, Din, Dout, *, tm=None, tn=None, tk=None,
                     compute_dtype=jnp.bfloat16, out_dtype=jnp.float32,
                     vmem_limit_bytes=None) -> LinearReluPlan:
    d = _device_defaults()
    tm = tm if tm is not None else d["tm"]
    tn = tn if tn is not None else d["tn"]
    tk = tk if tk is not None else d["tk"]
    vmem_limit_bytes = vmem_limit_bytes if vmem_limit_bytes is not None else d["vmem"]

    # bf16 packs 16 rows per vreg -> sublane unit 16 for 2-byte operands; lanes = 128.
    m_unit = 16 if jnp.dtype(compute_dtype).itemsize == 2 else 8
    tm = _pick_tile(B, tm, m_unit)
    tn = _pick_tile(Dout, tn, 128)
    tk = _pick_tile(Din, tk, 128)

    Mp = _round_up(B, tm)
    Np = _round_up(Dout, tn)
    Kp = _round_up(Din, tk)

    # v7x megacore: ensure >=2 parallel output blocks so both TensorCores get work
    # (only split when it costs no extra padding).
    if d["two_cores"] and (Mp // tm) * (Np // tn) < 2:
        if tn % 256 == 0:
            tn //= 2
        elif tm % (2 * m_unit) == 0:
            tm //= 2

    return LinearReluPlan(B, Din, Dout, tm, tn, tk, Mp, Kp, Np,
                          vmem_limit_bytes, compute_dtype, out_dtype)


def prepare_linear_relu_params(w, b, plan: LinearReluPlan):
    """One-time init: cast weight to the MXU dtype and pad to tile multiples.

    Hoisted out of the per-call path so the kernel streams bf16 weights directly
    from HBM instead of paying an extra f32->bf16 copy every call.
    """
    Din, Dout = w.shape
    assert (Din, Dout) == (plan.Din, plan.Dout)
    w_p = jnp.pad(w.astype(plan.compute_dtype),
                  ((0, plan.Kp - Din), (0, plan.Np - Dout)))
    b_p = jnp.pad(b.astype(jnp.float32), (0, plan.Np - Dout)).reshape(1, plan.Np)
    return w_p, b_p


def linear_relu_kernel(x_ref, w_ref, b_ref, o_ref, acc_ref):
    k = pl.program_id(2)

    # MXU matmul on bf16 tiles, f32 accumulation.
    partial = jnp.dot(x_ref[...], w_ref[...], preferred_element_type=jnp.float32)

    @pl.when(k == 0)
    def _first():
        acc_ref[...] = partial  # first k-step writes (no separate zero-fill pass)

    @pl.when(k > 0)
    def _accum():
        acc_ref[...] += partial

    @pl.when(k == pl.num_programs(2) - 1)
    def _epilogue():
        y = acc_ref[...] + b_ref[...]                      # (1, tn) broadcasts over tm
        o_ref[...] = jnp.maximum(y, NEG_SLOPE * y).astype(o_ref.dtype)


def make_linear_relu(plan: LinearReluPlan):
    """Build a jitted (x, w_p, b_p) -> LeakyReLU(x @ w + b) for a fixed plan."""
    grid = (plan.Mp // plan.tm, plan.Np // plan.tn, plan.Kp // plan.tk)

    in_itemsize = jnp.dtype(plan.compute_dtype).itemsize
    out_itemsize = jnp.dtype(plan.out_dtype).itemsize
    bytes_accessed = (plan.Mp * plan.Kp * in_itemsize
                      + plan.Kp * plan.Np * in_itemsize
                      + plan.Np * 4
                      + plan.Mp * plan.Np * out_itemsize)

    fwd = pl.pallas_call(
        linear_relu_kernel,
        out_shape=jax.ShapeDtypeStruct((plan.Mp, plan.Np), plan.out_dtype),
        grid=grid,
        in_specs=[
            pl.BlockSpec((plan.tm, plan.tk), lambda i, j, k: (i, k)),
            # NOTE: only add pipeline_mode=pl.Buffered(3) here if profiling shows
            # exposed weight DMA after enlarging tiles; keep 2 buffers on v7x.
            pl.BlockSpec((plan.tk, plan.tn), lambda i, j, k: (k, j)),
            pl.BlockSpec((1, plan.tn), lambda i, j, k: (0, j)),
        ],
        out_specs=pl.BlockSpec((plan.tm, plan.tn), lambda i, j, k: (i, j)),
        scratch_shapes=[pltpu.VMEM((plan.tm, plan.tn), jnp.float32)],
        compiler_params=pltpu.CompilerParams(
            dimension_semantics=("parallel", "parallel", "arbitrary"),
            vmem_limit_bytes=plan.vmem_limit_bytes,
        ),
        cost_estimate=pl.CostEstimate(
            flops=2 * plan.Mp * plan.Kp * plan.Np,
            transcendentals=0,
            bytes_accessed=bytes_accessed,
        ),
    )

    pad_m = plan.Mp - plan.B
    pad_k = plan.Kp - plan.Din
    needs_out_slice = (plan.Mp != plan.B) or (plan.Np != plan.Dout)

    @jax.jit
    def apply(x, w_p, b_p):
        x_p = x.astype(plan.compute_dtype)
        if pad_m or pad_k:
            x_p = jnp.pad(x_p, ((0, pad_m), (0, pad_k)))
        out = fwd(x_p, w_p, b_p)
        if needs_out_slice:
            out = out[:plan.B, :plan.Dout]
        return out

    return apply


if __name__ == "__main__":
    key = jax.random.PRNGKey(0)
    k_x, k_w, k_b = jax.random.split(key, 3)

    batch = 8
    input_neurons = 32
    output_neurons = 64

    # Deterministic param init mimicking nn.Linear's U(-1/sqrt(in), 1/sqrt(in)).
    bound = 1.0 / float(input_neurons) ** 0.5
    w = jax.random.uniform(
        k_w, (input_neurons, output_neurons), jnp.float32, -bound, bound
    )
    b = jax.random.uniform(k_b, (output_neurons,), jnp.float32, -bound, bound)
    x = jax.random.normal(k_x, (batch, input_neurons), jnp.float32)

    plan = plan_linear_relu(batch, input_neurons, output_neurons)
    w_p, b_p = prepare_linear_relu_params(w, b, plan)  # one-time, hoisted from hot path
    linear_relu = make_linear_relu(plan)

    out = linear_relu(x, w_p, b_p)
    jax.block_until_ready(out)
    assert out.shape == (batch, output_neurons)

    # Reference with the same bf16 MXU inputs / f32 accumulation as the kernel.
    ref = jnp.dot(
        x.astype(jnp.bfloat16),
        w.astype(jnp.bfloat16),
        preferred_element_type=jnp.float32,
    ) + b
    ref = jnp.where(ref > 0, ref, NEG_SLOPE * ref)
    assert jnp.allclose(out, ref, atol=1e-4, rtol=1e-4), "mismatch vs bf16 reference"

    # Sanity check vs the full-f32 PyTorch semantics (loose tol for bf16 MXU cast).
    ref_f32 = x @ w + b
    ref_f32 = jnp.where(ref_f32 > 0, ref_f32, NEG_SLOPE * ref_f32)
    assert jnp.allclose(out, ref_f32, atol=5e-2, rtol=5e-2), "mismatch vs f32 reference"

    print("KERNEL_OK")
</pallas_src>

<mosaic_0001>
module attributes {stable_mosaic.version = 11 : i64} {
  func.func @linear_relu_kernel(%arg0: i32, %arg1: i32, %arg2: i32, %arg3: memref<16x128xbf16, #tpu.memory_space<vmem>>, %arg4: memref<128x128xbf16, #tpu.memory_space<vmem>>, %arg5: memref<1x128xf32, #tpu.memory_space<vmem>>, %arg6: memref<16x128xf32, #tpu.memory_space<vmem>>, %arg7: memref<16x128xf32, #tpu.memory_space<vmem>>) attributes {dimension_semantics = [#tpu.dimension_semantics<parallel>, #tpu.dimension_semantics<parallel>, #tpu.dimension_semantics<arbitrary>], iteration_bounds = array<i64: 1, 1, 1>, scalar_prefetch = 0 : i64, scratch_operands = 1 : i64, tpu.core_type = #tpu.core_type<tc>, window_params = [{transform_indices = @transform_0, window_bounds = array<i64: 16, 128>}, {transform_indices = @transform_1, window_bounds = array<i64: 128, 128>}, {transform_indices = @transform_2, window_bounds = array<i64: 1, 128>}, {transform_indices = @transform_3, window_bounds = array<i64: 16, 128>}]} {
    %c0 = arith.constant 0 : index
    %c0_0 = arith.constant 0 : index
    %0 = vector.load %arg3[%c0, %c0_0] : memref<16x128xbf16, #tpu.memory_space<vmem>>, vector<16x128xbf16>
    %c0_1 = arith.constant 0 : index
    %c0_2 = arith.constant 0 : index
    %1 = vector.load %arg4[%c0_1, %c0_2] : memref<128x128xbf16, #tpu.memory_space<vmem>>, vector<128x128xbf16>
    %cst = arith.constant dense<0.000000e+00> : vector<16x128xf32>
    %2 = tpu.matmul %0, %1, %cst {dimension_numbers = #tpu.dot_dimension_numbers<[1], [0], [0], [1], [0, 0, 1, 1], [], []>} : vector<16x128xbf16>, vector<128x128xbf16>, vector<16x128xf32> -> vector<16x128xf32>
    %c0_i32 = arith.constant 0 : i32
    %3 = arith.cmpi eq, %arg2, %c0_i32 : i32
    %4 = arith.extui %3 : i1 to i32
    %c0_i32_3 = arith.constant 0 : i32
    %5 = arith.cmpi ne, %4, %c0_i32_3 : i32
    scf.if %5 {
      %c0_8 = arith.constant 0 : index
      %c0_9 = arith.constant 0 : index
      %12 = vector.load %arg7[%c0_8, %c0_9] : memref<16x128xf32, #tpu.memory_space<vmem>>, vector<16x128xf32>
      tpu.vector_store %arg7[%c0_8, %c0_9], %2 {strides = array<i32>} : memref<16x128xf32, #tpu.memory_space<vmem>>, vector<16x128xf32>,
    } else {
    }
    %c0_i32_4 = arith.constant 0 : i32
    %6 = arith.cmpi sgt, %arg2, %c0_i32_4 : i32
    %7 = arith.extui %6 : i1 to i32
    %c0_i32_5 = arith.constant 0 : i32
    %8 = arith.cmpi ne, %7, %c0_i32_5 : i32
    scf.if %8 {
      %c0_8 = arith.constant 0 : index
      %c0_9 = arith.constant 0 : index
      %12 = vector.load %arg7[%c0_8, %c0_9] : memref<16x128xf32, #tpu.memory_space<vmem>>, vector<16x128xf32>
      %13 = arith.addf %12, %2 : vector<16x128xf32>
      %c0_10 = arith.constant 0 : index
      %c0_11 = arith.constant 0 : index
      %14 = vector.load %arg7[%c0_10, %c0_11] : memref<16x128xf32, #tpu.memory_space<vmem>>, vector<16x128xf32>
      tpu.vector_store %arg7[%c0_10, %c0_11], %13 {strides = array<i32>} : memref<16x128xf32, #tpu.memory_space<vmem>>, vector<16x128xf32>,
    } else {
    }
    %c0_i32_6 = arith.constant 0 : i32
    %9 = arith.cmpi eq, %arg2, %c0_i32_6 : i32
    %10 = arith.extui %9 : i1 to i32
    %c0_i32_7 = arith.constant 0 : i32
    %11 = arith.cmpi ne, %10, %c0_i32_7 : i32
    scf.if %11 {
      %c0_8 = arith.constant 0 : index
      %c0_9 = arith.constant 0 : index
      %12 = vector.load %arg7[%c0_8, %c0_9] : memref<16x128xf32, #tpu.memory_space<vmem>>, vector<16x128xf32>
      %c0_10 = arith.constant 0 : index
      %c0_11 = arith.constant 0 : index
      %13 = vector.load %arg5[%c0_10, %c0_11] : memref<1x128xf32, #tpu.memory_space<vmem>>, vector<1x128xf32>
      %14 = vector.broadcast %13 : vector<1x128xf32> to vector<16x128xf32>
      %15 = arith.addf %12, %14 : vector<16x128xf32>
      %cst_12 = arith.constant 0.00999999977 : f32
      %16 = vector.broadcast %cst_12 : f32 to vector<16x128xf32>
      %17 = arith.mulf %16, %15 : vector<16x128xf32>
      %18 = arith.maximumf %15, %17 : vector<16x128xf32>
      %c0_13 = arith.constant 0 : index
      %c0_14 = arith.constant 0 : index
      %19 = vector.load %arg6[%c0_13, %c0_14] : memref<16x128xf32, #tpu.memory_space<vmem>>, vector<16x128xf32>
      tpu.vector_store %arg6[%c0_13, %c0_14], %18 {strides = array<i32>} : memref<16x128xf32, #tpu.memory_space<vmem>>, vector<16x128xf32>,
    } else {
    }
    return
  }
  func.func @transform_0(%arg0: i32, %arg1: i32, %arg2: i32) -> (i32, i32) {
    %c0_i32 = arith.constant 0 : i32
    return %arg0, %arg2 : i32, i32
  }
  func.func @transform_1(%arg0: i32, %arg1: i32, %arg2: i32) -> (i32, i32) {
    %c0_i32 = arith.constant 0 : i32
    return %arg2, %arg1 : i32, i32
  }
  func.func @transform_2(%arg0: i32, %arg1: i32, %arg2: i32) -> (i32, i32) {
    %c0_i32 = arith.constant 0 : i32
    %c0_i32_0 = arith.constant 0 : i32
    return %c0_i32, %arg1 : i32, i32
  }
  func.func @transform_3(%arg0: i32, %arg1: i32, %arg2: i32) -> (i32, i32) {
    %c0_i32 = arith.constant 0 : i32
    return %arg0, %arg1 : i32, i32
  }
}

</mosaic_0001>

<llo_original>
// kernel: apply.1
$region0: #{apply.1}
  #allocation0 [shape = 'u32[]', space=smem, size = 0x4, offset = 0x4, fixed_abs, tag = 'smem constant byte address 0x4 - core index']
  #allocation1 [shape = 'u32[144,128]{1,0:T(1,128)}', space=vmem, size = 0x12000, scoped, tag = 'internal scratch']
  #allocation2 [shape = 'f32[16,128]{1,0:T(8,128)}', space=vmem, size = 0x2000, scoped, tag = 'scratch operand']
  %s0 = inlined_call_operand.vmem [shape: bf16[16,128], index: 0, kind: input, shape index: {}]
  %s1 = inlined_call_operand.hbm [shape: bf16[128,128], index: 1, kind: input, shape index: {}]
  %s2 = inlined_call_operand.vmem [shape: f32[1,128], index: 2, kind: input, shape index: {}]
  %s3 = inlined_call_operand.vmem [shape: f32[16,128], index: 3, kind: output, shape index: {}]
  %s4 = sld [smem:[#allocation0]]
  $region38: #{apply.1} parent=0
    _
  %s6 = ssub.s32 1, %s4
  %s7 = scalar_select 0, %s6, %s4
  $region1: #{apply.1} parent=0
    #allocation3 [shape = 'u8[32768]{0}', space=vmem, size = 0x8000, scoped, tag = 'input window, operand 1, single buffered']
    #allocation4 [shape = 's32[1]{0}', space=sflag, size = 0x4, scoped, tag = 'scoped memory for apply.1']
    %8 = vsyncpa [#allocation4], 0
    // Predicated region
    $region2: #{apply.1} parent=1 // pred_check
      _
    $region3: #{apply.1} parent=1 // pred_check_branch
      %10 = sbr.rel (0) target = $region5
    $region4: #{apply.1} parent=1 // pred_region
      _
    $region5: #{apply.1} parent=1 // pred_fallthru
      _
    // Predicated region
    $region6: #{apply.1} parent=1 // pred_check
      _
    $region7: #{apply.1} parent=1 // pred_check_branch
      %12 = sbr.rel (0) target = $region9
    $region8: #{apply.1} parent=1 // pred_region
      %s14 = ssub.s32 1024, 1024
      %15 = vsyncadd [#allocation4], %s14
      %s16 = sshll.u32 [#allocation3], 4
      %s17 = int_to_ptr.vmem [resolvable:$true] %s16
      %22 = dma.hbm_to_vmem [thread:$0]  %s1, 1024, %s17, [#allocation4], 64, 64, 4
    $region9: #{apply.1} parent=1 // pred_fallthru
      _
    // Predicated region
    $region10: #{apply.1} parent=1 // pred_check
      _
    $region11: #{apply.1} parent=1 // pred_check_branch
      %24 = sbr.rel (0) target = $region13
    $region12: #{apply.1} parent=1 // pred_region
      _
    $region13: #{apply.1} parent=1 // pred_fallthru
      _
    // Predicated region
    $region14: #{apply.1} parent=1 // pred_check
      _
    $region15: #{apply.1} parent=1 // pred_check_branch
      %26 = sbr.rel (0) target = $region17
    $region16: #{apply.1} parent=1 // pred_region
      %27 = dma.done [#allocation4], 1024
    $region17: #{apply.1} parent=1 // pred_fallthru
      _
    %v29 = vld [vmem:[%s0] sm:$0xf]
    %v30 = vld [vmem:[%s0 + $0x4] sm:$0xf]
    %v31 = vld [vmem:[#allocation3] sm:$0xf]
    %v32 = vld [vmem:[#allocation3 + $0x4] sm:$0xf]
    %v33 = vld [vmem:[#allocation3 + $0x8] sm:$0xf]
    %v34 = vld [vmem:[#allocation3 + $0xc] sm:$0xf]
    %v35 = vld [vmem:[#allocation3 + $0x10] sm:$0xf]
    %v36 = vld [vmem:[#allocation3 + $0x14] sm:$0xf]
    %v37 = vld [vmem:[#allocation3 + $0x18] sm:$0xf]
    %v38 = vld [vmem:[#allocation3 + $0x1c] sm:$0xf]
    %v39 = vld [vmem:[#allocation3 + $0x20] sm:$0xf]
    %v40 = vld [vmem:[#allocation3 + $0x24] sm:$0xf]
    %v41 = vld [vmem:[#allocation3 + $0x28] sm:$0xf]
    %v42 = vld [vmem:[#allocation3 + $0x2c] sm:$0xf]
    %v43 = vld [vmem:[#allocation3 + $0x30] sm:$0xf]
    %v44 = vld [vmem:[#allocation3 + $0x34] sm:$0xf]
    %v45 = vld [vmem:[#allocation3 + $0x38] sm:$0xf]
    %v46 = vld [vmem:[#allocation3 + $0x3c] sm:$0xf]
    %v49 = vunpack.c.l.b16 %v29
    %v50 = vunpack.c.l.b16 %v30
    %v51 = vpack.c.b16 %v50, %v49
    %v69 = vunpack.c.l.b16 %v31
    %v70 = vunpack.c.l.b16 %v32
    %v71 = vunpack.c.l.b16 %v33
    %v72 = vunpack.c.l.b16 %v34
    %v73 = vunpack.c.l.b16 %v35
    %v74 = vunpack.c.l.b16 %v36
    %v75 = vunpack.c.l.b16 %v37
    %v76 = vunpack.c.l.b16 %v38
    %v77 = vunpack.c.l.b16 %v39
    %v78 = vunpack.c.l.b16 %v40
    %v79 = vunpack.c.l.b16 %v41
    %v80 = vunpack.c.l.b16 %v42
    %v81 = vunpack.c.l.b16 %v43
    %v82 = vunpack.c.l.b16 %v44
    %v83 = vunpack.c.l.b16 %v45
    %v84 = vunpack.c.l.b16 %v46
    %v85 = vpack.c.b16 %v70, %v69
    %v86 = vpack.c.b16 %v72, %v71
    %v87 = vpack.c.b16 %v74, %v73
    %v88 = vpack.c.b16 %v76, %v75
    %v89 = vpack.c.b16 %v78, %v77
    %v90 = vpack.c.b16 %v80, %v79
    %v91 = vpack.c.b16 %v82, %v81
    %v92 = vpack.c.b16 %v84, %v83
    %101 = vmatprep.subr.bf16.mxu0 0
    %102 = vmatpush1.bf16.msra.mxu0 %v92
    %103 = vmatprep.subr.bf16.mxu0 0
    %104 = vmatpush1.bf16.msra.mxu0 %v91
    %105 = vmatprep.subr.bf16.mxu0 0
    %106 = vmatpush1.bf16.msra.mxu0 %v90
    %107 = vmatprep.subr.bf16.mxu0 0
    %108 = vmatpush1.bf16.msra.mxu0 %v89
    %109 = vmatprep.subr.bf16.mxu0 0
    %110 = vmatpush1.bf16.msra.mxu0 %v88
    %111 = vmatprep.subr.bf16.mxu0 0
    %112 = vmatpush1.bf16.msra.mxu0 %v87
    %113 = vmatprep.subr.bf16.mxu0 0
    %114 = vmatpush1.bf16.msra.mxu0 %v86
    %115 = vmatprep.subr.bf16.mxu0 0
    %116 = vmatpush1.bf16.msra.mxu0 %v85
    %117 = vmatprep.subr.bf16.mxu0 0
    %118 = vmatpush2.bf16.msra.mxu0 0
    %119 = vmatprep.subr.bf16.mxu0 0
    %120 = vmatpush2.bf16.msra.mxu0 0
    %121 = vmatprep.subr.bf16.mxu0 0
    %122 = vmatpush2.bf16.msra.mxu0 0
    %123 = vmatprep.subr.bf16.mxu0 0
    %124 = vmatpush2.bf16.msra.mxu0 0
    %125 = vmatprep.subr.bf16.mxu0 0
    %126 = vmatpush2.bf16.msra.mxu0 0
    %127 = vmatprep.subr.bf16.mxu0 0
    %128 = vmatpush2.bf16.msra.mxu0 0
    %129 = vmatprep.subr.bf16.mxu0 0
    %130 = vmatpush2.bf16.msra.mxu0 0
    %131 = vmatprep.subr.bf16.mxu0 0
    %132 = vmatpush2.bf16.msra.mxu0 0
    %133 = vmatprep.mubr.bf16.mxu0 0
    %134 = vmatmul.mubr.bf16.gmra.mxu0 %v51
    %v135 = vpop.f32.mrf.mxu0
    %v136 = vadd.f32 0.0, %v135
    %v137 = vpop.f32.mrf.mxu0
    %v138 = vpop.f32.mrf.mxu0
    %v139 = vadd.f32 0.0, %v138
    %v140 = vpop.f32.mrf.mxu0
    %141 = vdwg.mxu0
    %p142 = scmp.eq.s32.totalorder 0, 0
    // Predicated region
    $region18: #{apply.1} parent=1 // pred_check
      %p143 = pneg %p142
    $region19: #{apply.1} parent=1 // pred_check_branch
      %145 = sbr.rel (%p143) target = $region21
    $region20: #{apply.1} parent=1 // pred_region
      %146 = vst [vmem:[#allocation2] sm:$0xff] %v136
      %147 = vst [vmem:[#allocation2 + $0x8] sm:$0xff] %v139
    $region21: #{apply.1} parent=1 // pred_fallthru
      _
    %p148 = scmp.gt.s32.totalorder 0, 0
    // Predicated region
    $region22: #{apply.1} parent=1 // pred_check
      %p149 = pneg %p148
    $region23: #{apply.1} parent=1 // pred_check_branch
      %151 = sbr.rel (%p149) target = $region25
    $region24: #{apply.1} parent=1 // pred_region
      %v152 = vld [vmem:[#allocation2] sm:$0xff]
      %v153 = vld [vmem:[#allocation2 + $0x8] sm:$0xff]
      %v154 = vadd.f32 %v152, %v136
      %v155 = vadd.f32 %v153, %v139
      %156 = vst [vmem:[#allocation2] sm:$0xff] %v154
      %157 = vst [vmem:[#allocation2 + $0x8] sm:$0xff] %v155
    $region25: #{apply.1} parent=1 // pred_fallthru
      _
    // Predicated region
    $region26: #{apply.1} parent=1 // pred_check
      %p158 = pneg %p142
    $region27: #{apply.1} parent=1 // pred_check_branch
      %160 = sbr.rel (%p158) target = $region29
    $region28: #{apply.1} parent=1 // pred_region
      %v161 = vld [vmem:[#allocation2] sm:$0xff]
      %v162 = vld [vmem:[#allocation2 + $0x8] sm:$0xff]
      %v163 = vld [vmem:[%s2] sm:$0x1]
      %v165 = vlaneseq
      %v166 = vshrl.u32 %v165, 7
      %v167 = vsub.s32 0, %v166
      %v168 = vrot.slane %v163, %v167
      %v170 = vadd.f32 %v161, %v168
      %v171 = vadd.f32 %v162, %v168
      %v172 = vmul.f32 %v170, 0.01
      %v173 = vmul.f32 %v171, 0.01
      %v174 = vmax.f32 %v170, %v172
      %v175 = vmax.f32 %v171, %v173
      %176 = vst [vmem:[%s3] sm:$0xff] %v174
      %177 = vst [vmem:[%s3 + $0x8] sm:$0xff] %v175
    $region29: #{apply.1} parent=1 // pred_fallthru
      _
    // Predicated region
    $region30: #{apply.1} parent=1 // pred_check
      _
    $region31: #{apply.1} parent=1 // pred_check_branch
      %179 = sbr.rel (0) target = $region33
    $region32: #{apply.1} parent=1 // pred_region
      _
    $region33: #{apply.1} parent=1 // pred_fallthru
      _
    // Predicated region
    $region34: #{apply.1} parent=1 // pred_check
      _
    $region35: #{apply.1} parent=1 // pred_check_branch
      %181 = sbr.rel (0) target = $region37
    $region36: #{apply.1} parent=1 // pred_region
      _
    $region37: #{apply.1} parent=1 // pred_fallthru
      _
    %182 = vsyncpa [#allocation4], 1

</llo_original>
